<compile_context>
chip_gen: v6e
topology: v6e:2x2x1
jax: 0.10.0
libtpu: 0.0.40
codegen_flags: <defaults>
</compile_context>

<pallas_src>
import functools

import jax
import jax.numpy as jnp
from jax.experimental import pallas as pl
from jax.experimental.pallas import tpu as pltpu


def _round_up(a, b):
    return (a + b - 1) // b * b


def born_sqrt_kernel(x_ref, wr_ref, wi_ref, o_ref, acc_r, acc_i):
    """One grid step:
         acc_r += sqrt(x_tile) @ Wr_tile ; acc_i += sqrt(x_tile) @ Wi_tile
       On the last K step finalize with acc_r^2 + acc_i^2 (Born rule)."""
    k = pl.program_id(2)  # K (reduction) is always the innermost grid axis.

    @pl.when(k == 0)
    def _init():
        acc_r[...] = jnp.zeros_like(acc_r)
        acc_i[...] = jnp.zeros_like(acc_i)

    # sqrt in f32 (clamped at 0 to avoid NaN; PyTorch's torch.sqrt would
    # propagate NaN for negative inputs -- documented behavioral difference),
    # then cast to the matmul operand dtype.
    xs = jnp.sqrt(jnp.maximum(x_ref[...].astype(jnp.float32), 0.0))
    xs = xs.astype(wr_ref.dtype)

    acc_r[...] += jnp.dot(xs, wr_ref[...], preferred_element_type=jnp.float32)
    acc_i[...] += jnp.dot(xs, wi_ref[...], preferred_element_type=jnp.float32)

    @pl.when(k == pl.num_programs(2) - 1)
    def _finalize():
        re = acc_r[...]
        im = acc_i[...]
        o_ref[...] = (re * re + im * im).astype(o_ref.dtype)


def prepare_born_weight(weight, compute_dtype=jnp.bfloat16):
    """Hoistable one-time cast of the [2, K, M] Born weight to the matmul
    dtype (for repeated inference, do this once; the per-call cast inside
    born_sqrt then becomes a no-op)."""
    return weight.astype(compute_dtype)


@functools.partial(jax.jit, static_argnames=("tm", "tn", "tk", "compute_dtype"))
def born_sqrt(x, weight, *, tm=256, tn=512, tk=1024,
              compute_dtype=jnp.bfloat16):
    """x: [N, K] (non-negative), weight: [2, K, M].

    compute_dtype: dtype of the matmul operands (jnp.bfloat16 default,
    jnp.float32 for exact parity with the f32 PyTorch module).  MXU
    accumulation is always float32.
    """
    N, K = x.shape
    two, Kw, M = weight.shape
    assert two == 2 and Kw == K

    w_bytes = jnp.dtype(compute_dtype).itemsize
    x_bytes = jnp.dtype(x.dtype).itemsize

    # --- tile sizing -------------------------------------------------------
    # Clamp tiles to (tiling-aligned) problem dims; small problems collapse.
    tm = min(tm, _round_up(N, 8))
    tn = min(tn, _round_up(M, 128))
    tk = min(tk, _round_up(K, 128))

    # Keep >=2 blocks along a "parallel" axis so a second TensorCore (v7x)
    # has work even for small problems.
    if _round_up(N, tm) // tm == 1 and _round_up(M, tn) // tn == 1:
        if tn >= 256:
            tn = max(128, _round_up(tn // 2, 128))
        elif tm >= 16:
            tm = max(8, _round_up(tm // 2, 8))

    # Explicit VMEM budget for double-buffered tiles (+ accumulators);
    # ~40 MiB fits every generation once vmem_limit_bytes is raised to 48 MiB
    # (v7x physical VMEM is 64 MiB).
    def vmem_est(tm_, tn_, tk_):
        return (2 * tm_ * tk_ * x_bytes        # x double-buffer
                + 2 * 2 * tk_ * tn_ * w_bytes  # Wr + Wi double-buffers
                + 2 * tm_ * tn_ * 4            # out double-buffer
                + 2 * tm_ * tn_ * 4)           # two f32 accumulators
    VMEM_BUDGET = 40 * 1024 * 1024
    while vmem_est(tm, tn, tk) > VMEM_BUDGET and tk > 128:
        tk = max(128, _round_up(tk // 2, 128))
    while vmem_est(tm, tn, tk) > VMEM_BUDGET and tn > 128:
        tn = max(128, _round_up(tn // 2, 128))

    N_pad = _round_up(N, tm)
    M_pad = _round_up(M, tn)
    K_pad = _round_up(K, tk)

    # --- operand prep (no interleave copy; cast is a no-op if pre-cast) ----
    wr = weight[0].astype(compute_dtype)
    wi = weight[1].astype(compute_dtype)
    if (K_pad, M_pad) != (K, M):
        wr = jnp.pad(wr, ((0, K_pad - K), (0, M_pad - M)))
        wi = jnp.pad(wi, ((0, K_pad - K), (0, M_pad - M)))
    x_p = x
    if (N_pad, K_pad) != (N, K):
        x_p = jnp.pad(x, ((0, N_pad - N), (0, K_pad - K)))

    Mt, Nt, Kt = M_pad // tn, N_pad // tm, K_pad // tk

    # --- adaptive grid order: re-stream the SMALLER operand ---------------
    bytes_x_tot = N_pad * K_pad * x_bytes
    bytes_w_tot = 2 * K_pad * M_pad * w_bytes
    if bytes_w_tot >= bytes_x_tot:
        # Weights dominate: j (output-column tile) outermost, so when K
        # collapses the weight block index is unchanged across batch tiles
        # and only x (the smaller stream) is re-streamed Mt times.
        grid = (Mt, Nt, Kt)
        x_map = lambda j, i, k: (i, k)
        w_map = lambda j, i, k: (k, j)
        o_map = lambda j, i, k: (i, j)
    else:
        # Activations dominate: i (batch tile) outermost.
        grid = (Nt, Mt, Kt)
        x_map = lambda i, j, k: (i, k)
        w_map = lambda i, j, k: (k, j)
        o_map = lambda i, j, k: (i, j)

    cost = pl.CostEstimate(
        flops=2 * 2 * N * K * M + 3 * N * M,
        transcendentals=N * K,                       # sqrt
        bytes_accessed=bytes_x_tot + bytes_w_tot + N_pad * M_pad * 4,
    )

    out = pl.pallas_call(
        born_sqrt_kernel,
        out_shape=jax.ShapeDtypeStruct((N_pad, M_pad), x.dtype),
        grid_spec=pltpu.PrefetchScalarGridSpec(
            num_scalar_prefetch=0,
            grid=grid,
            in_specs=[
                pl.BlockSpec((tm, tk), x_map),   # sqrt'ed activations tile
                pl.BlockSpec((tk, tn), w_map),   # Wr tile
                pl.BlockSpec((tk, tn), w_map),   # Wi tile
            ],
            out_specs=pl.BlockSpec((tm, tn), o_map),
            scratch_shapes=[
                pltpu.VMEM((tm, tn), jnp.float32),   # real accumulator
                pltpu.VMEM((tm, tn), jnp.float32),   # imag accumulator
            ],
        ),
        compiler_params=pltpu.CompilerParams(
            dimension_semantics=("parallel", "parallel", "arbitrary"),
            vmem_limit_bytes=48 * 1024 * 1024,
        ),
        cost_estimate=cost,
    )(x_p, wr, wi)

    return out[:N, :M]


def init_born_weight(key, in_features, out_features, dtype=jnp.float32):
    """Deterministic synthetic init of the Born weight [2, in, out]
    (real + imaginary parts), roughly unit-scale like the PyTorch module."""
    k_r, k_i = jax.random.split(key)
    scale = 1.0 / jnp.sqrt(jnp.asarray(in_features, dtype))
    w_r = jax.random.uniform(k_r, (in_features, out_features), dtype,
                             minval=-1.0, maxval=1.0) * scale
    w_i = jax.random.uniform(k_i, (in_features, out_features), dtype,
                             minval=-1.0, maxval=1.0) * scale
    return jnp.stack([w_r, w_i], axis=0)


if __name__ == "__main__":
    key = jax.random.PRNGKey(0)
    k_x, k_w = jax.random.split(key)

    N, K, M = 16, 256, 256  # batch, in_features, out_features
    # x must be non-negative (it is sqrt'ed, e.g. counts / TF-IDF features).
    x = jax.random.uniform(k_x, (N, K), jnp.float32, minval=0.0, maxval=2.0)
    weight = init_born_weight(k_w, K, M)

    y = jnp.sqrt(x)

    # --- f32 operand path: exact parity with the f32 PyTorch module -------
    out_f32 = born_sqrt(x, weight, compute_dtype=jnp.float32)
    out_f32 = jax.block_until_ready(out_f32)
    ref_f32 = jnp.square(y @ weight[0]) + jnp.square(y @ weight[1])
    assert out_f32.shape == (N, M)
    assert jnp.allclose(out_f32, ref_f32, atol=1e-4, rtol=1e-4), \
        "f32 mismatch vs ref"

    # --- default bf16 operand path (halved weight HBM stream) -------------
    w_prep = prepare_born_weight(weight, jnp.bfloat16)  # hoisted cast
    out_bf16 = born_sqrt(x, w_prep)
    out_bf16 = jax.block_until_ready(out_bf16)
    yb = y.astype(jnp.bfloat16)
    ref_bf16 = (
        jnp.square(jnp.dot(yb, weight[0].astype(jnp.bfloat16),
                           preferred_element_type=jnp.float32))
        + jnp.square(jnp.dot(yb, weight[1].astype(jnp.bfloat16),
                             preferred_element_type=jnp.float32))
    )
    assert out_bf16.shape == (N, M)
    assert jnp.allclose(out_bf16, ref_bf16, atol=2e-2, rtol=2e-2), \
        "bf16 mismatch vs ref"

    print("KERNEL_OK")
</pallas_src>

<mosaic_0001>
module attributes {stable_mosaic.version = 11 : i64} {
  func.func @born_sqrt_kernel(%arg0: i32, %arg1: i32, %arg2: i32, %arg3: memref<16x256xf32, #tpu.memory_space<vmem>>, %arg4: memref<256x128xf32, #tpu.memory_space<vmem>>, %arg5: memref<256x128xf32, #tpu.memory_space<vmem>>, %arg6: memref<16x128xf32, #tpu.memory_space<vmem>>, %arg7: memref<16x128xf32, #tpu.memory_space<vmem>>, %arg8: memref<16x128xf32, #tpu.memory_space<vmem>>) attributes {dimension_semantics = [#tpu.dimension_semantics<parallel>, #tpu.dimension_semantics<parallel>, #tpu.dimension_semantics<arbitrary>], iteration_bounds = array<i64: 2, 1, 1>, scalar_prefetch = 0 : i64, scratch_operands = 2 : i64, tpu.core_type = #tpu.core_type<tc>, window_params = [{transform_indices = @transform_0, window_bounds = array<i64: 16, 256>}, {transform_indices = @transform_1, window_bounds = array<i64: 256, 128>}, {transform_indices = @transform_2, window_bounds = array<i64: 256, 128>}, {transform_indices = @transform_3, window_bounds = array<i64: 16, 128>}]} {
    %c0_i32 = arith.constant 0 : i32
    %0 = arith.cmpi eq, %arg2, %c0_i32 : i32
    %1 = arith.extui %0 : i1 to i32
    %c0_i32_0 = arith.constant 0 : i32
    %2 = arith.cmpi ne, %1, %c0_i32_0 : i32
    scf.if %2 {
      %cst_18 = arith.constant 0.000000e+00 : f32
      %20 = vector.broadcast %cst_18 : f32 to vector<16x128xf32>
      %c0_19 = arith.constant 0 : index
      %c0_20 = arith.constant 0 : index
      %21 = vector.load %arg7[%c0_19, %c0_20] : memref<16x128xf32, #tpu.memory_space<vmem>>, vector<16x128xf32>
      tpu.vector_store %arg7[%c0_19, %c0_20], %20 {strides = array<i32>} : memref<16x128xf32, #tpu.memory_space<vmem>>, vector<16x128xf32>,
      %cst_21 = arith.constant 0.000000e+00 : f32
      %22 = vector.broadcast %cst_21 : f32 to vector<16x128xf32>
      %c0_22 = arith.constant 0 : index
      %c0_23 = arith.constant 0 : index
      %23 = vector.load %arg8[%c0_22, %c0_23] : memref<16x128xf32, #tpu.memory_space<vmem>>, vector<16x128xf32>
      tpu.vector_store %arg8[%c0_22, %c0_23], %22 {strides = array<i32>} : memref<16x128xf32, #tpu.memory_space<vmem>>, vector<16x128xf32>,
    } else {
    }
    %c0 = arith.constant 0 : index
    %c0_1 = arith.constant 0 : index
    %3 = vector.load %arg3[%c0, %c0_1] : memref<16x256xf32, #tpu.memory_space<vmem>>, vector<16x256xf32>
    %cst = arith.constant 0.000000e+00 : f32
    %4 = vector.broadcast %cst : f32 to vector<16x256xf32>
    %5 = arith.maximumf %3, %4 : vector<16x256xf32>
    %6 = math.sqrt %5 : vector<16x256xf32>
    %c0_2 = arith.constant 0 : index
    %c0_3 = arith.constant 0 : index
    %7 = vector.load %arg7[%c0_2, %c0_3] : memref<16x128xf32, #tpu.memory_space<vmem>>, vector<16x128xf32>
    %c0_4 = arith.constant 0 : index
    %c0_5 = arith.constant 0 : index
    %8 = vector.load %arg4[%c0_4, %c0_5] : memref<256x128xf32, #tpu.memory_space<vmem>>, vector<256x128xf32>
    %cst_6 = arith.constant dense<0.000000e+00> : vector<16x128xf32>
    %9 = tpu.matmul %6, %8, %cst_6 {dimension_numbers = #tpu.dot_dimension_numbers<[1], [0], [0], [1], [0, 0, 1, 1], [], []>} : vector<16x256xf32>, vector<256x128xf32>, vector<16x128xf32> -> vector<16x128xf32>
    %10 = arith.addf %7, %9 : vector<16x128xf32>
    %c0_7 = arith.constant 0 : index
    %c0_8 = arith.constant 0 : index
    %11 = vector.load %arg7[%c0_7, %c0_8] : memref<16x128xf32, #tpu.memory_space<vmem>>, vector<16x128xf32>
    tpu.vector_store %arg7[%c0_7, %c0_8], %10 {strides = array<i32>} : memref<16x128xf32, #tpu.memory_space<vmem>>, vector<16x128xf32>,
    %c0_9 = arith.constant 0 : index
    %c0_10 = arith.constant 0 : index
    %12 = vector.load %arg8[%c0_9, %c0_10] : memref<16x128xf32, #tpu.memory_space<vmem>>, vector<16x128xf32>
    %c0_11 = arith.constant 0 : index
    %c0_12 = arith.constant 0 : index
    %13 = vector.load %arg5[%c0_11, %c0_12] : memref<256x128xf32, #tpu.memory_space<vmem>>, vector<256x128xf32>
    %cst_13 = arith.constant dense<0.000000e+00> : vector<16x128xf32>
    %14 = tpu.matmul %6, %13, %cst_13 {dimension_numbers = #tpu.dot_dimension_numbers<[1], [0], [0], [1], [0, 0, 1, 1], [], []>} : vector<16x256xf32>, vector<256x128xf32>, vector<16x128xf32> -> vector<16x128xf32>
    %15 = arith.addf %12, %14 : vector<16x128xf32>
    %c0_14 = arith.constant 0 : index
    %c0_15 = arith.constant 0 : index
    %16 = vector.load %arg8[%c0_14, %c0_15] : memref<16x128xf32, #tpu.memory_space<vmem>>, vector<16x128xf32>
    tpu.vector_store %arg8[%c0_14, %c0_15], %15 {strides = array<i32>} : memref<16x128xf32, #tpu.memory_space<vmem>>, vector<16x128xf32>,
    %c0_i32_16 = arith.constant 0 : i32
    %17 = arith.cmpi eq, %arg2, %c0_i32_16 : i32
    %18 = arith.extui %17 : i1 to i32
    %c0_i32_17 = arith.constant 0 : i32
    %19 = arith.cmpi ne, %18, %c0_i32_17 : i32
    scf.if %19 {
      %c0_18 = arith.constant 0 : index
      %c0_19 = arith.constant 0 : index
      %20 = vector.load %arg7[%c0_18, %c0_19] : memref<16x128xf32, #tpu.memory_space<vmem>>, vector<16x128xf32>
      %c0_20 = arith.constant 0 : index
      %c0_21 = arith.constant 0 : index
      %21 = vector.load %arg8[%c0_20, %c0_21] : memref<16x128xf32, #tpu.memory_space<vmem>>, vector<16x128xf32>
      %22 = arith.mulf %20, %20 : vector<16x128xf32>
      %23 = arith.mulf %21, %21 : vector<16x128xf32>
      %24 = arith.addf %22, %23 : vector<16x128xf32>
      %c0_22 = arith.constant 0 : index
      %c0_23 = arith.constant 0 : index
      %25 = vector.load %arg6[%c0_22, %c0_23] : memref<16x128xf32, #tpu.memory_space<vmem>>, vector<16x128xf32>
      tpu.vector_store %arg6[%c0_22, %c0_23], %24 {strides = array<i32>} : memref<16x128xf32, #tpu.memory_space<vmem>>, vector<16x128xf32>,
    } else {
    }
    return
  }
  func.func @transform_0(%arg0: i32, %arg1: i32, %arg2: i32) -> (i32, i32) {
    %c0_i32 = arith.constant 0 : i32
    return %arg1, %arg2 : i32, i32
  }
  func.func @transform_1(%arg0: i32, %arg1: i32, %arg2: i32) -> (i32, i32) {
    %c0_i32 = arith.constant 0 : i32
    return %arg2, %arg0 : i32, i32
  }
  func.func @transform_2(%arg0: i32, %arg1: i32, %arg2: i32) -> (i32, i32) {
    %c0_i32 = arith.constant 0 : i32
    return %arg2, %arg0 : i32, i32
  }
  func.func @transform_3(%arg0: i32, %arg1: i32, %arg2: i32) -> (i32, i32) {
    %c0_i32 = arith.constant 0 : i32
    return %arg1, %arg0 : i32, i32
  }
}

</mosaic_0001>

<llo_original>
// kernel: born_sqrt.1
$region0: #{born_sqrt.1}
  #allocation0 [shape = 'u32[]', space=smem, size = 0x4, offset = 0x4, fixed_abs, tag = 'smem constant byte address 0x4 - core index']
  #allocation1 [shape = 'u32[144,128]{1,0:T(1,128)}', space=vmem, size = 0x12000, scoped, tag = 'internal scratch']
  #allocation2 [shape = 'f32[16,128]{1,0:T(8,128)}', space=vmem, size = 0x2000, scoped, tag = 'scratch operand']
  #allocation3 [shape = 'f32[16,128]{1,0:T(8,128)}', space=vmem, size = 0x2000, scoped, tag = 'scratch operand']
  %s0 = inlined_call_operand.vmem [shape: f32[16,256], index: 0, kind: input, shape index: {}]
  %s1 = inlined_call_operand.vmem [shape: f32[256,256], index: 1, kind: input, shape index: {}]
  %s2 = inlined_call_operand.vmem [shape: f32[256,256], index: 2, kind: input, shape index: {}]
  %s3 = inlined_call_operand.hbm [shape: f32[16,256], index: 3, kind: output, shape index: {}]
  %s4 = sld [smem:[#allocation0]]
  $region129: #{born_sqrt.1} parent=0
    _
  %s6 = ssub.s32 1, %s4
  %s7 = scalar_select 0, %s6, %s4
  $region1: #{born_sqrt.1} parent=0
    #allocation4 [shape = 'u8[262144]{0}', space=vmem, size = 0x40000, scoped, tag = 'input window, operand 1']
    #allocation5 [shape = 'u8[262144]{0}', space=vmem, size = 0x40000, scoped, tag = 'input window, operand 2']
    #allocation6 [shape = 'u8[16384]{0}', space=vmem, size = 0x4000, scoped, tag = 'output window, operand 0']
    #allocation7 [shape = 's32[2]{0}', space=sflag, size = 0x8, scoped, tag = 'scoped memory for born_sqrt.1']
    %8 = vsyncpa [#allocation7], 0
    %s9 = scalar_lea.sflag [#allocation7], 1
    %10 = vsyncpa %s9, 0
    loop: start=0, step=1, limit=4
    $region2: #{born_sqrt.1} parent=1 // loop_pre_header
      _
    $region3: #{born_sqrt.1} parent=1 // loop_header
      %s12 = sphi 0, %s16
      %p13 = scmp.ge.s32.totalorder %s12, 4
      %s19 = sphi 0, %s38
      %s20 = sphi 0, %s34
      %s21 = sphi 0, %s30
      %s22 = sphi 0, %s19
      %s23 = sphi 0, %s20
      %s24 = sphi 0, %s21
      %s25 = sphi 0, %s22
      %s26 = sphi 0, %s23
      %s27 = sphi 0, %s24
      %s43 = sphi 0, %s45
      %s46 = sphi 0, %s43
      %s47 = sphi 0, %s46
      %s63 = sphi 0, %s47
      %s71 = sphi 0, %s73
      %s74 = sphi 0, %s71
      %s75 = sphi 0, %s74
      %s91 = sphi 0, %s75
      %s99 = sphi 0, %s101
      %s102 = sphi 0, %s99
      %s103 = sphi 0, %s102
      %s119 = sphi 0, %s103
      %s127 = sphi 0, %s129
      %s130 = sphi 0, %s127
      %s131 = sphi 0, %s130
      %s147 = sphi 0, %s131
    $region4: #{born_sqrt.1} parent=1 // loop_header_branch
      %15 = sbr.rel (%p13) target = $region8
    $region5: #{born_sqrt.1} parent=1 // loop_body
      %s17 = ssub.s32 %s12, 1
      %s18 = ssub.s32 %s12, 2
      %s28 = sadd.s32 1, %s21
      %p29 = scmp.ge.s32.totalorder %s28, 1
      %s30 = scalar_select %p29, 0, %s28
      %s31 = sadd.s32 1, %s20
      %s32 = scalar_select %p29, %s31, %s20
      %p33 = scmp.ge.s32.totalorder %s32, 1
      %s34 = scalar_select %p33, 0, %s32
      %s35 = sadd.s32 1, %s19
      %s36 = scalar_select %p33, %s35, %s19
      %p37 = scmp.ge.s32.totalorder %s36, 2
      %s38 = scalar_select %p37, 0, %s36
      %s39 = ssub.s32 %s20, %s34
      %s40 = ssub.s32 %s21, %s30
      %s41 = sor.u32 %s39, %s40
      %p42 = scmp.eq.s32.totalorder %s41, 0
      %s44 = sadd.s32 %s43, 1
      %s45 = scalar_select %p42, %s43, %s44
      %p48 = pneg %p42
      %p49 = scmp.eq.s32.totalorder %s12, 1
      %p50 = por %p48, %p49
      %p51 = scmp.ne.s32.totalorder %s43, %s46
      %p52 = scmp.eq.s32.totalorder %s12, 0
      %p53 = por %p51, %p52
      %p54 = scmp.ne.s32.totalorder %s43, %s46
      %p55 = scmp.eq.s32.totalorder %s17, 1
      %p56 = por %p54, %p55
      %p57 = scmp.ne.s32.totalorder %s46, %s47
      %p58 = scmp.eq.s32.totalorder %s17, 0
      %p59 = por %p57, %p58
      %p60 = scmp.ne.s32.totalorder %s46, %s47
      %p61 = scmp.eq.s32.totalorder %s18, 1
      %p62 = por %p60, %p61
      %p64 = scmp.ne.s32.totalorder %s47, %s63
      %p65 = scmp.eq.s32.totalorder %s18, 0
      %p66 = por %p64, %p65
      %s67 = ssub.s32 %s21, %s30
      %s68 = ssub.s32 %s19, %s38
      %s69 = sor.u32 %s67, %s68
      %p70 = scmp.eq.s32.totalorder %s69, 0
      %s72 = sadd.s32 %s71, 1
      %s73 = scalar_select %p70, %s71, %s72
      %p76 = pneg %p70
      %p77 = scmp.eq.s32.totalorder %s12, 1
      %p78 = por %p76, %p77
      %p79 = scmp.ne.s32.totalorder %s71, %s74
      %p80 = scmp.eq.s32.totalorder %s12, 0
      %p81 = por %p79, %p80
      %p82 = scmp.ne.s32.totalorder %s71, %s74
      %p83 = scmp.eq.s32.totalorder %s17, 1
      %p84 = por %p82, %p83
      %p85 = scmp.ne.s32.totalorder %s74, %s75
      %p86 = scmp.eq.s32.totalorder %s17, 0
      %p87 = por %p85, %p86
      %p88 = scmp.ne.s32.totalorder %s74, %s75
      %p89 = scmp.eq.s32.totalorder %s18, 1
      %p90 = por %p88, %p89
      %p92 = scmp.ne.s32.totalorder %s75, %s91
      %p93 = scmp.eq.s32.totalorder %s18, 0
      %p94 = por %p92, %p93
      %s95 = ssub.s32 %s21, %s30
      %s96 = ssub.s32 %s19, %s38
      %s97 = sor.u32 %s95, %s96
      %p98 = scmp.eq.s32.totalorder %s97, 0
      %s100 = sadd.s32 %s99, 1
      %s101 = scalar_select %p98, %s99, %s100
      %p104 = pneg %p98
      %p105 = scmp.eq.s32.totalorder %s12, 1
      %p106 = por %p104, %p105
      %p107 = scmp.ne.s32.totalorder %s99, %s102
      %p108 = scmp.eq.s32.totalorder %s12, 0
      %p109 = por %p107, %p108
      %p110 = scmp.ne.s32.totalorder %s99, %s102
      %p111 = scmp.eq.s32.totalorder %s17, 1
      %p112 = por %p110, %p111
      %p113 = scmp.ne.s32.totalorder %s102, %s103
      %p114 = scmp.eq.s32.totalorder %s17, 0
      %p115 = por %p113, %p114
      %p116 = scmp.ne.s32.totalorder %s102, %s103
      %p117 = scmp.eq.s32.totalorder %s18, 1
      %p118 = por %p116, %p117
      %p120 = scmp.ne.s32.totalorder %s103, %s119
      %p121 = scmp.eq.s32.totalorder %s18, 0
      %p122 = por %p120, %p121
      %s123 = ssub.s32 %s20, %s34
      %s124 = ssub.s32 %s19, %s38
      %s125 = sor.u32 %s123, %s124
      %p126 = scmp.eq.s32.totalorder %s125, 0
      %s128 = sadd.s32 %s127, 1
      %s129 = scalar_select %p126, %s127, %s128
      %p132 = pneg %p126
      %p133 = scmp.eq.s32.totalorder %s12, 1
      %p134 = por %p132, %p133
      %p135 = scmp.ne.s32.totalorder %s127, %s130
      %p136 = scmp.eq.s32.totalorder %s12, 0
      %p137 = por %p135, %p136
      %p138 = scmp.ne.s32.totalorder %s127, %s130
      %p139 = scmp.eq.s32.totalorder %s17, 1
      %p140 = por %p138, %p139
      %p141 = scmp.ne.s32.totalorder %s130, %s131
      %p142 = scmp.eq.s32.totalorder %s17, 0
      %p143 = por %p141, %p142
      %p144 = scmp.ne.s32.totalorder %s130, %s131
      %p145 = scmp.eq.s32.totalorder %s18, 1
      %p146 = por %p144, %p145
      %p148 = scmp.ne.s32.totalorder %s131, %s147
      %p149 = scmp.eq.s32.totalorder %s18, 0
      %p150 = por %p148, %p149
      %p151 = scmp.le.s32.totalorder 1, %s12
      %p152 = scmp.lt.s32.totalorder %s12, 3
      %p153 = pnand %p151, %p152
      %p154 = pneg %p153
      // Predicated region
      $region9: #{born_sqrt.1} parent=5 // pred_check
        _
      $region10: #{born_sqrt.1} parent=5 // pred_check_branch
        %156 = sbr.rel (%p153) target = $region12
      $region11: #{born_sqrt.1} parent=5 // pred_region
        %s157 = ssub.s32 %s12, 1
        // Predicated region
        $region13: #{born_sqrt.1} parent=11 // pred_check
          %p158 = pneg %p59
        $region14: #{born_sqrt.1} parent=11 // pred_check_branch
          %160 = sbr.rel (%p158) target = $region16
        $region15: #{born_sqrt.1} parent=11 // pred_region
          %s161 = smul.u32 2, %s23
          %s162 = smul.u32 2, %s24
          %p163 = scmp.lt.s32.totalorder %s161, 1
          %s164 = scalar_select %p163, %s161, 1
          %p165 = scmp.lt.s32.totalorder %s162, 1
          %s166 = scalar_select %p165, %s162, 1
          %s167 = smul.addr %s164, 2
          %s168 = sadd.s32 %s166, %s167
          %s169 = smul.addr %s168, 8
          %s170 = scalar_lea.vmem %s0, %s169
          %s171 = smul.u32 2, %s23
          %s172 = smul.u32 2, %s24
        $region16: #{born_sqrt.1} parent=11 // pred_fallthru
          _
      $region12: #{born_sqrt.1} parent=5 // pred_fallthru
        _
      %p173 = scmp.lt.s32.totalorder %s12, 2
      // Predicated region
      $region17: #{born_sqrt.1} parent=5 // pred_check
        %p174 = pneg %p173
      $region18: #{born_sqrt.1} parent=5 // pred_check_branch
        %176 = sbr.rel (%p174) target = $region20
      $region19: #{born_sqrt.1} parent=5 // pred_region
        // Predicated region
        $region21: #{born_sqrt.1} parent=19 // pred_check
          %p177 = pneg %p81
        $region22: #{born_sqrt.1} parent=19 // pred_check_branch
          %179 = sbr.rel (%p177) target = $region24
        $region23: #{born_sqrt.1} parent=19 // pred_region
          %s180 = sand.u32 %s71, 1
          %s181 = sand.u32 %s71, 1
          %s182 = smul.addr %s181, 256
          %s183 = scalar_lea.vmem [#allocation4], %s182
          %s184 = smul.u32 32, %s21
          %s185 = smul.addr %s184, 2
          %s186 = sadd.s32 %s19, %s185
          %s187 = smul.addr %s186, 8
          %s188 = scalar_lea.vmem %s1, %s187
          // Predicated region
          $region25: #{born_sqrt.1} parent=23 // pred_check
            _
          $region26: #{born_sqrt.1} parent=23 // pred_check_branch
            %190 = sbr.rel (0) target = $region28
          $region27: #{born_sqrt.1} parent=23 // pred_region
            // Predicated region
            $region29: #{born_sqrt.1} parent=27 // pred_check
              _
            $region30: #{born_sqrt.1} parent=27 // pred_check_branch
              %192 = sbr.rel (0) target = $region32
            $region31: #{born_sqrt.1} parent=27 // pred_region
              // Predicated region
              $region44: #{born_sqrt.1} parent=31 // pred_check
                _
              $region45: #{born_sqrt.1} parent=31 // pred_check_branch
                %270 = sbr.rel (0) target = $region47
              $region46: #{born_sqrt.1} parent=31 // pred_region
                loop: start=0, step=1, limit=1
                $region48: #{born_sqrt.1} parent=46 // loop_pre_header
                  _
                $region49: #{born_sqrt.1} parent=46 // loop_header
                  %s272 = sphi 0, %s276
                  %p273 = scmp.ge.s32.totalorder %s272, 1
                  %s277 = sphi %s188, %s188
                  %s278 = sphi %s183, %s183
                $region50: #{born_sqrt.1} parent=46 // loop_header_branch
                  %275 = sbr.rel (%p273) target = $region54
                $region51: #{born_sqrt.1} parent=46 // loop_body
                  %v279 = vld [vmem:[%s277] sm:$0xff]
                  %280 = vst [vmem:[%s278] sm:$0xff] %v279
                  %v281 = vld [vmem:[%s277 + $0x10] sm:$0xff]
                  %282 = vst [vmem:[%s278 + $0x8] sm:$0xff] %v281
                  %v283 = vld [vmem:[%s277 + $0x20] sm:$0xff]
                  %284 = vst [vmem:[%s278 + $0x10] sm:$0xff] %v283
                  %v285 = vld [vmem:[%s277 + $0x30] sm:$0xff]
                  %286 = vst [vmem:[%s278 + $0x18] sm:$0xff] %v285
                  %v287 = vld [vmem:[%s277 + $0x40] sm:$0xff]
                  %288 = vst [vmem:[%s278 + $0x20] sm:$0xff] %v287
                  %v289 = vld [vmem:[%s277 + $0x50] sm:$0xff]
                  %290 = vst [vmem:[%s278 + $0x28] sm:$0xff] %v289
                  %v291 = vld [vmem:[%s277 + $0x60] sm:$0xff]
                  %292 = vst [vmem:[%s278 + $0x30] sm:$0xff] %v291
                  %v293 = vld [vmem:[%s277 + $0x70] sm:$0xff]
                  %294 = vst [vmem:[%s278 + $0x38] sm:$0xff] %v293
                  %v295 = vld [vmem:[%s277 + $0x80] sm:$0xff]
                  %296 = vst [vmem:[%s278 + $0x40] sm:$0xff] %v295
                  %v297 = vld [vmem:[%s277 + $0x90] sm:$0xff]
                  %298 = vst [vmem:[%s278 + $0x48] sm:$0xff] %v297
                  %v299 = vld [vmem:[%s277 + $0xa0] sm:$0xff]
                  %300 = vst [vmem:[%s278 + $0x50] sm:$0xff] %v299
                  %v301 = vld [vmem:[%s277 + $0xb0] sm:$0xff]
                  %302 = vst [vmem:[%s278 + $0x58] sm:$0xff] %v301
                  %v303 = vld [vmem:[%s277 + $0xc0] sm:$0xff]
                  %304 = vst [vmem:[%s278 + $0x60] sm:$0xff] %v303
                  %v305 = vld [vmem:[%s277 + $0xd0] sm:$0xff]
                  %306 = vst [vmem:[%s278 + $0x68] sm:$0xff] %v305
                  %v307 = vld [vmem:[%s277 + $0xe0] sm:$0xff]
                  %308 = vst [vmem:[%s278 + $0x70] sm:$0xff] %v307
                  %v309 = vld [vmem:[%s277 + $0xf0] sm:$0xff]
                  %310 = vst [vmem:[%s278 + $0x78] sm:$0xff] %v309
                  %v311 = vld [vmem:[%s277 + $0x100] sm:$0xff]
                  %312 = vst [vmem:[%s278 + $0x80] sm:$0xff] %v311
                  %v313 = vld [vmem:[%s277 + $0x110] sm:$0xff]
                  %314 = vst [vmem:[%s278 + $0x88] sm:$0xff] %v313
                  %v315 = vld [vmem:[%s277 + $0x120] sm:$0xff]
                  %316 = vst [vmem:[%s278 + $0x90] sm:$0xff] %v315
                  %v317 = vld [vmem:[%s277 + $0x130] sm:$0xff]
                  %318 = vst [vmem:[%s278 + $0x98] sm:$0xff] %v317
                  %v319 = vld [vmem:[%s277 + $0x140] sm:$0xff]
                  %320 = vst [vmem:[%s278 + $0xa0] sm:$0xff] %v319
                  %v321 = vld [vmem:[%s277 + $0x150] sm:$0xff]
                  %322 = vst [vmem:[%s278 + $0xa8] sm:$0xff] %v321
                  %v323 = vld [vmem:[%s277 + $0x160] sm:$0xff]
                  %324 = vst [vmem:[%s278 + $0xb0] sm:$0xff] %v323
                  %v325 = vld [vmem:[%s277 + $0x170] sm:$0xff]
                  %326 = vst [vmem:[%s278 + $0xb8] sm:$0xff] %v325
                  %v327 = vld [vmem:[%s277 + $0x180] sm:$0xff]
                  %328 = vst [vmem:[%s278 + $0xc0] sm:$0xff] %v327
                  %v329 = vld [vmem:[%s277 + $0x190] sm:$0xff]
                  %330 = vst [vmem:[%s278 + $0xc8] sm:$0xff] %v329
                  %v331 = vld [vmem:[%s277 + $0x1a0] sm:$0xff]
                  %332 = vst [vmem:[%s278 + $0xd0] sm:$0xff] %v331
                  %v333 = vld [vmem:[%s277 + $0x1b0] sm:$0xff]
                  %334 = vst [vmem:[%s278 + $0xd8] sm:$0xff] %v333
                  %v335 = vld [vmem:[%s277 + $0x1c0] sm:$0xff]
                  %336 = vst [vmem:[%s278 + $0xe0] sm:$0xff] %v335
                  %v337 = vld [vmem:[%s277 + $0x1d0] sm:$0xff]
                  %338 = vst [vmem:[%s278 + $0xe8] sm:$0xff] %v337
                  %v339 = vld [vmem:[%s277 + $0x1e0] sm:$0xff]
                  %340 = vst [vmem:[%s278 + $0xf0] sm:$0xff] %v339
                  %v341 = vld [vmem:[%s277 + $0x1f0] sm:$0xff]
                  %342 = vst [vmem:[%s278 + $0xf8] sm:$0xff] %v341
                $region52: #{born_sqrt.1} parent=46 // loop_footer
                  %s276 = sadd.s32 1, %s272
                $region53: #{born_sqrt.1} parent=46 // loop_footer_branch
                  %271 = sbr.rel target = $region49
                $region54: #{born_sqrt.1} parent=46 // loop_exit
                  _
              $region47: #{born_sqrt.1} parent=31 // pred_fallthru
                _
              // Predicated region
              $region55: #{born_sqrt.1} parent=31 // pred_check
                _
              $region56: #{born_sqrt.1} parent=31 // pred_check_branch
                %344 = sbr.rel target = $region58
              $region57: #{born_sqrt.1} parent=31 // pred_region
                _
              $region58: #{born_sqrt.1} parent=31 // pred_fallthru
                _
            $region32: #{born_sqrt.1} parent=27 // pred_fallthru
              _
            // Predicated region
            $region33: #{born_sqrt.1} parent=27 // pred_check
              _
            $region34: #{born_sqrt.1} parent=27 // pred_check_branch
              %194 = sbr.rel target = $region36
            $region35: #{born_sqrt.1} parent=27 // pred_region
              %s196 = ssub.s32 256, 1
              loop: start=0, step=1, limit=1
              $region37: #{born_sqrt.1} parent=35 // loop_pre_header
                _
              $region38: #{born_sqrt.1} parent=35 // loop_header
                %s198 = sphi 0, %s202
                %p199 = scmp.ge.s32.totalorder %s198, 1
                %s203 = sphi %s188, %s188
                %s204 = sphi %s183, %s183
              $region39: #{born_sqrt.1} parent=35 // loop_header_branch
                %201 = sbr.rel (%p199) target = $region43
              $region40: #{born_sqrt.1} parent=35 // loop_body
                %v205 = vld [vmem:[%s203] sm:%s196]
                %206 = vst [vmem:[%s204] sm:%s196] %v205
                %v207 = vld [vmem:[%s203 + $0x10] sm:%s196]
                %208 = vst [vmem:[%s204 + $0x8] sm:%s196] %v207
                %v209 = vld [vmem:[%s203 + $0x20] sm:%s196]
                %210 = vst [vmem:[%s204 + $0x10] sm:%s196] %v209
                %v211 = vld [vmem:[%s203 + $0x30] sm:%s196]
                %212 = vst [vmem:[%s204 + $0x18] sm:%s196] %v211
                %v213 = vld [vmem:[%s203 + $0x40] sm:%s196]
                %214 = vst [vmem:[%s204 + $0x20] sm:%s196] %v213
                %v215 = vld [vmem:[%s203 + $0x50] sm:%s196]
                %216 = vst [vmem:[%s204 + $0x28] sm:%s196] %v215
                %v217 = vld [vmem:[%s203 + $0x60] sm:%s196]
                %218 = vst [vmem:[%s204 + $0x30] sm:%s196] %v217
                %v219 = vld [vmem:[%s203 + $0x70] sm:%s196]
                %220 = vst [vmem:[%s204 + $0x38] sm:%s196] %v219
                %v221 = vld [vmem:[%s203 + $0x80] sm:%s196]
                %222 = vst [vmem:[%s204 + $0x40] sm:%s196] %v221
                %v223 = vld [vmem:[%s203 + $0x90] sm:%s196]
                %224 = vst [vmem:[%s204 + $0x48] sm:%s196] %v223
                %v225 = vld [vmem:[%s203 + $0xa0] sm:%s196]
                %226 = vst [vmem:[%s204 + $0x50] sm:%s196] %v225
                %v227 = vld [vmem:[%s203 + $0xb0] sm:%s196]
                %228 = vst [vmem:[%s204 + $0x58] sm:%s196] %v227
                %v229 = vld [vmem:[%s203 + $0xc0] sm:%s196]
                %230 = vst [vmem:[%s204 + $0x60] sm:%s196] %v229
                %v231 = vld [vmem:[%s203 + $0xd0] sm:%s196]
                %232 = vst [vmem:[%s204 + $0x68] sm:%s196] %v231
                %v233 = vld [vmem:[%s203 + $0xe0] sm:%s196]
                %234 = vst [vmem:[%s204 + $0x70] sm:%s196] %v233
                %v235 = vld [vmem:[%s203 + $0xf0] sm:%s196]
                %236 = vst [vmem:[%s204 + $0x78] sm:%s196] %v235
                %v237 = vld [vmem:[%s203 + $0x100] sm:%s196]
                %238 = vst [vmem:[%s204 + $0x80] sm:%s196] %v237
                %v239 = vld [vmem:[%s203 + $0x110] sm:%s196]
                %240 = vst [vmem:[%s204 + $0x88] sm:%s196] %v239
                %v241 = vld [vmem:[%s203 + $0x120] sm:%s196]
                %242 = vst [vmem:[%s204 + $0x90] sm:%s196] %v241
                %v243 = vld [vmem:[%s203 + $0x130] sm:%s196]
                %244 = vst [vmem:[%s204 + $0x98] sm:%s196] %v243
                %v245 = vld [vmem:[%s203 + $0x140] sm:%s196]
                %246 = vst [vmem:[%s204 + $0xa0] sm:%s196] %v245
                %v247 = vld [vmem:[%s203 + $0x150] sm:%s196]
                %248 = vst [vmem:[%s204 + $0xa8] sm:%s196] %v247
                %v249 = vld [vmem:[%s203 + $0x160] sm:%s196]
                %250 = vst [vmem:[%s204 + $0xb0] sm:%s196] %v249
                %v251 = vld [vmem:[%s203 + $0x170] sm:%s196]
                %252 = vst [vmem:[%s204 + $0xb8] sm:%s196] %v251
                %v253 = vld [vmem:[%s203 + $0x180] sm:%s196]
                %254 = vst [vmem:[%s204 + $0xc0] sm:%s196] %v253
                %v255 = vld [vmem:[%s203 + $0x190] sm:%s196]
                %256 = vst [vmem:[%s204 + $0xc8] sm:%s196] %v255
                %v257 = vld [vmem:[%s203 + $0x1a0] sm:%s196]
                %258 = vst [vmem:[%s204 + $0xd0] sm:%s196] %v257
                %v259 = vld [vmem:[%s203 + $0x1b0] sm:%s196]
                %260 = vst [vmem:[%s204 + $0xd8] sm:%s196] %v259
                %v261 = vld [vmem:[%s203 + $0x1c0] sm:%s196]
                %262 = vst [vmem:[%s204 + $0xe0] sm:%s196] %v261
                %v263 = vld [vmem:[%s203 + $0x1d0] sm:%s196]
                %264 = vst [vmem:[%s204 + $0xe8] sm:%s196] %v263
                %v265 = vld [vmem:[%s203 + $0x1e0] sm:%s196]
                %266 = vst [vmem:[%s204 + $0xf0] sm:%s196] %v265
                %v267 = vld [vmem:[%s203 + $0x1f0] sm:%s196]
                %268 = vst [vmem:[%s204 + $0xf8] sm:%s196] %v267
              $region41: #{born_sqrt.1} parent=35 // loop_footer
                %s202 = sadd.s32 1, %s198
              $region42: #{born_sqrt.1} parent=35 // loop_footer_branch
                %197 = sbr.rel target = $region38
              $region43: #{born_sqrt.1} parent=35 // loop_exit
                _
            $region36: #{born_sqrt.1} parent=27 // pred_fallthru
              _
          $region28: #{born_sqrt.1} parent=23 // pred_fallthru
            _
          %345 = vnop
        $region24: #{born_sqrt.1} parent=19 // pred_fallthru
          _
        // Predicated region
        $region59: #{born_sqrt.1} parent=19 // pred_check
          %p346 = pneg %p109
        $region60: #{born_sqrt.1} parent=19 // pred_check_branch
          %348 = sbr.rel (%p346) target = $region62
        $region61: #{born_sqrt.1} parent=19 // pred_region
          %s349 = sand.u32 %s99, 1
          %s350 = sand.u32 %s99, 1
          %s351 = smul.addr %s350, 256
          %s352 = scalar_lea.vmem [#allocation5], %s351
          %s353 = smul.u32 32, %s21
          %s354 = smul.addr %s353, 2
          %s355 = sadd.s32 %s19, %s354
          %s356 = smul.addr %s355, 8
          %s357 = scalar_lea.vmem %s2, %s356
          // Predicated region
          $region63: #{born_sqrt.1} parent=61 // pred_check
            _
          $region64: #{born_sqrt.1} parent=61 // pred_check_branch
            %359 = sbr.rel (0) target = $region66
          $region65: #{born_sqrt.1} parent=61 // pred_region
            // Predicated region
            $region67: #{born_sqrt.1} parent=65 // pred_check
              _
            $region68: #{born_sqrt.1} parent=65 // pred_check_branch
              %361 = sbr.rel (0) target = $region70
            $region69: #{born_sqrt.1} parent=65 // pred_region
              // Predicated region
              $region82: #{born_sqrt.1} parent=69 // pred_check
                _
              $region83: #{born_sqrt.1} parent=69 // pred_check_branch
                %439 = sbr.rel (0) target = $region85
              $region84: #{born_sqrt.1} parent=69 // pred_region
                loop: start=0, step=1, limit=1
                $region86: #{born_sqrt.1} parent=84 // loop_pre_header
                  _
                $region87: #{born_sqrt.1} parent=84 // loop_header
                  %s441 = sphi 0, %s445
                  %p442 = scmp.ge.s32.totalorder %s441, 1
                  %s446 = sphi %s357, %s357
                  %s447 = sphi %s352, %s352
                $region88: #{born_sqrt.1} parent=84 // loop_header_branch
                  %444 = sbr.rel (%p442) target = $region92
                $region89: #{born_sqrt.1} parent=84 // loop_body
                  %v448 = vld [vmem:[%s446] sm:$0xff]
                  %449 = vst [vmem:[%s447] sm:$0xff] %v448
                  %v450 = vld [vmem:[%s446 + $0x10] sm:$0xff]
                  %451 = vst [vmem:[%s447 + $0x8] sm:$0xff] %v450
                  %v452 = vld [vmem:[%s446 + $0x20] sm:$0xff]
                  %453 = vst [vmem:[%s447 + $0x10] sm:$0xff] %v452
                  %v454 = vld [vmem:[%s446 + $0x30] sm:$0xff]
                  %455 = vst [vmem:[%s447 + $0x18] sm:$0xff] %v454
                  %v456 = vld [vmem:[%s446 + $0x40] sm:$0xff]
                  %457 = vst [vmem:[%s447 + $0x20] sm:$0xff] %v456
                  %v458 = vld [vmem:[%s446 + $0x50] sm:$0xff]
                  %459 = vst [vmem:[%s447 + $0x28] sm:$0xff] %v458
                  %v460 = vld [vmem:[%s446 + $0x60] sm:$0xff]
                  %461 = vst [vmem:[%s447 + $0x30] sm:$0xff] %v460
                  %v462 = vld [vmem:[%s446 + $0x70] sm:$0xff]
                  %463 = vst [vmem:[%s447 + $0x38] sm:$0xff] %v462
                  %v464 = vld [vmem:[%s446 + $0x80] sm:$0xff]
                  %465 = vst [vmem:[%s447 + $0x40] sm:$0xff] %v464
                  %v466 = vld [vmem:[%s446 + $0x90] sm:$0xff]
                  %467 = vst [vmem:[%s447 + $0x48] sm:$0xff] %v466
                  %v468 = vld [vmem:[%s446 + $0xa0] sm:$0xff]
                  %469 = vst [vmem:[%s447 + $0x50] sm:$0xff] %v468
                  %v470 = vld [vmem:[%s446 + $0xb0] sm:$0xff]
                  %471 = vst [vmem:[%s447 + $0x58] sm:$0xff] %v470
                  %v472 = vld [vmem:[%s446 + $0xc0] sm:$0xff]
                  %473 = vst [vmem:[%s447 + $0x60] sm:$0xff] %v472
                  %v474 = vld [vmem:[%s446 + $0xd0] sm:$0xff]
                  %475 = vst [vmem:[%s447 + $0x68] sm:$0xff] %v474
                  %v476 = vld [vmem:[%s446 + $0xe0] sm:$0xff]
                  %477 = vst [vmem:[%s447 + $0x70] sm:$0xff] %v476
                  %v478 = vld [vmem:[%s446 + $0xf0] sm:$0xff]
                  %479 = vst [vmem:[%s447 + $0x78] sm:$0xff] %v478
                  %v480 = vld [vmem:[%s446 + $0x100] sm:$0xff]
                  %481 = vst [vmem:[%s447 + $0x80] sm:$0xff] %v480
                  %v482 = vld [vmem:[%s446 + $0x110] sm:$0xff]
                  %483 = vst [vmem:[%s447 + $0x88] sm:$0xff] %v482
                  %v484 = vld [vmem:[%s446 + $0x120] sm:$0xff]
                  %485 = vst [vmem:[%s447 + $0x90] sm:$0xff] %v484
                  %v486 = vld [vmem:[%s446 + $0x130] sm:$0xff]
                  %487 = vst [vmem:[%s447 + $0x98] sm:$0xff] %v486
                  %v488 = vld [vmem:[%s446 + $0x140] sm:$0xff]
                  %489 = vst [vmem:[%s447 + $0xa0] sm:$0xff] %v488
                  %v490 = vld [vmem:[%s446 + $0x150] sm:$0xff]
                  %491 = vst [vmem:[%s447 + $0xa8] sm:$0xff] %v490
                  %v492 = vld [vmem:[%s446 + $0x160] sm:$0xff]
                  %493 = vst [vmem:[%s447 + $0xb0] sm:$0xff] %v492
                  %v494 = vld [vmem:[%s446 + $0x170] sm:$0xff]
                  %495 = vst [vmem:[%s447 + $0xb8] sm:$0xff] %v494
                  %v496 = vld [vmem:[%s446 + $0x180] sm:$0xff]
                  %497 = vst [vmem:[%s447 + $0xc0] sm:$0xff] %v496
                  %v498 = vld [vmem:[%s446 + $0x190] sm:$0xff]
                  %499 = vst [vmem:[%s447 + $0xc8] sm:$0xff] %v498
                  %v500 = vld [vmem:[%s446 + $0x1a0] sm:$0xff]
                  %501 = vst [vmem:[%s447 + $0xd0] sm:$0xff] %v500
                  %v502 = vld [vmem:[%s446 + $0x1b0] sm:$0xff]
                  %503 = vst [vmem:[%s447 + $0xd8] sm:$0xff] %v502
                  %v504 = vld [vmem:[%s446 + $0x1c0] sm:$0xff]
                  %505 = vst [vmem:[%s447 + $0xe0] sm:$0xff] %v504
                  %v506 = vld [vmem:[%s446 + $0x1d0] sm:$0xff]
                  %507 = vst [vmem:[%s447 + $0xe8] sm:$0xff] %v506
                  %v508 = vld [vmem:[%s446 + $0x1e0] sm:$0xff]
                  %509 = vst [vmem:[%s447 + $0xf0] sm:$0xff] %v508
                  %v510 = vld [vmem:[%s446 + $0x1f0] sm:$0xff]
                  %511 = vst [vmem:[%s447 + $0xf8] sm:$0xff] %v510
                $region90: #{born_sqrt.1} parent=84 // loop_footer
                  %s445 = sadd.s32 1, %s441
                $region91: #{born_sqrt.1} parent=84 // loop_footer_branch
                  %440 = sbr.rel target = $region87
                $region92: #{born_sqrt.1} parent=84 // loop_exit
                  _
              $region85: #{born_sqrt.1} parent=69 // pred_fallthru
                _
              // Predicated region
              $region93: #{born_sqrt.1} parent=69 // pred_check
                _
              $region94: #{born_sqrt.1} parent=69 // pred_check_branch
                %513 = sbr.rel target = $region96
              $region95: #{born_sqrt.1} parent=69 // pred_region
                _
              $region96: #{born_sqrt.1} parent=69 // pred_fallthru
                _
            $region70: #{born_sqrt.1} parent=65 // pred_fallthru
              _
            // Predicated region
            $region71: #{born_sqrt.1} parent=65 // pred_check
              _
            $region72: #{born_sqrt.1} parent=65 // pred_check_branch
              %363 = sbr.rel target = $region74
            $region73: #{born_sqrt.1} parent=65 // pred_region
              %s365 = ssub.s32 256, 1
              loop: start=0, step=1, limit=1
              $region75: #{born_sqrt.1} parent=73 // loop_pre_header
                _
              $region76: #{born_sqrt.1} parent=73 // loop_header
                %s367 = sphi 0, %s371
                %p368 = scmp.ge.s32.totalorder %s367, 1
                %s372 = sphi %s357, %s357
                %s373 = sphi %s352, %s352
              $region77: #{born_sqrt.1} parent=73 // loop_header_branch
                %370 = sbr.rel (%p368) target = $region81
              $region78: #{born_sqrt.1} parent=73 // loop_body
                %v374 = vld [vmem:[%s372] sm:%s365]
                %375 = vst [vmem:[%s373] sm:%s365] %v374
                %v376 = vld [vmem:[%s372 + $0x10] sm:%s365]
                %377 = vst [vmem:[%s373 + $0x8] sm:%s365] %v376
                %v378 = vld [vmem:[%s372 + $0x20] sm:%s365]
                %379 = vst [vmem:[%s373 + $0x10] sm:%s365] %v378
                %v380 = vld [vmem:[%s372 + $0x30] sm:%s365]
                %381 = vst [vmem:[%s373 + $0x18] sm:%s365] %v380
                %v382 = vld [vmem:[%s372 + $0x40] sm:%s365]
                %383 = vst [vmem:[%s373 + $0x20] sm:%s365] %v382
                %v384 = vld [vmem:[%s372 + $0x50] sm:%s365]
                %385 = vst [vmem:[%s373 + $0x28] sm:%s365] %v384
                %v386 = vld [vmem:[%s372 + $0x60] sm:%s365]
                %387 = vst [vmem:[%s373 + $0x30] sm:%s365] %v386
                %v388 = vld [vmem:[%s372 + $0x70] sm:%s365]
                %389 = vst [vmem:[%s373 + $0x38] sm:%s365] %v388
                %v390 = vld [vmem:[%s372 + $0x80] sm:%s365]
                %391 = vst [vmem:[%s373 + $0x40] sm:%s365] %v390
                %v392 = vld [vmem:[%s372 + $0x90] sm:%s365]
                %393 = vst [vmem:[%s373 + $0x48] sm:%s365] %v392
                %v394 = vld [vmem:[%s372 + $0xa0] sm:%s365]
                %395 = vst [vmem:[%s373 + $0x50] sm:%s365] %v394
                %v396 = vld [vmem:[%s372 + $0xb0] sm:%s365]
                %397 = vst [vmem:[%s373 + $0x58] sm:%s365] %v396
                %v398 = vld [vmem:[%s372 + $0xc0] sm:%s365]
                %399 = vst [vmem:[%s373 + $0x60] sm:%s365] %v398
                %v400 = vld [vmem:[%s372 + $0xd0] sm:%s365]
                %401 = vst [vmem:[%s373 + $0x68] sm:%s365] %v400
                %v402 = vld [vmem:[%s372 + $0xe0] sm:%s365]
                %403 = vst [vmem:[%s373 + $0x70] sm:%s365] %v402
                %v404 = vld [vmem:[%s372 + $0xf0] sm:%s365]
                %405 = vst [vmem:[%s373 + $0x78] sm:%s365] %v404
                %v406 = vld [vmem:[%s372 + $0x100] sm:%s365]
                %407 = vst [vmem:[%s373 + $0x80] sm:%s365] %v406
                %v408 = vld [vmem:[%s372 + $0x110] sm:%s365]
                %409 = vst [vmem:[%s373 + $0x88] sm:%s365] %v408
                %v410 = vld [vmem:[%s372 + $0x120] sm:%s365]
                %411 = vst [vmem:[%s373 + $0x90] sm:%s365] %v410
                %v412 = vld [vmem:[%s372 + $0x130] sm:%s365]
                %413 = vst [vmem:[%s373 + $0x98] sm:%s365] %v412
                %v414 = vld [vmem:[%s372 + $0x140] sm:%s365]
                %415 = vst [vmem:[%s373 + $0xa0] sm:%s365] %v414
                %v416 = vld [vmem:[%s372 + $0x150] sm:%s365]
                %417 = vst [vmem:[%s373 + $0xa8] sm:%s365] %v416
                %v418 = vld [vmem:[%s372 + $0x160] sm:%s365]
                %419 = vst [vmem:[%s373 + $0xb0] sm:%s365] %v418
                %v420 = vld [vmem:[%s372 + $0x170] sm:%s365]
                %421 = vst [vmem:[%s373 + $0xb8] sm:%s365] %v420
                %v422 = vld [vmem:[%s372 + $0x180] sm:%s365]
                %423 = vst [vmem:[%s373 + $0xc0] sm:%s365] %v422
                %v424 = vld [vmem:[%s372 + $0x190] sm:%s365]
                %425 = vst [vmem:[%s373 + $0xc8] sm:%s365] %v424
                %v426 = vld [vmem:[%s372 + $0x1a0] sm:%s365]
                %427 = vst [vmem:[%s373 + $0xd0] sm:%s365] %v426
                %v428 = vld [vmem:[%s372 + $0x1b0] sm:%s365]
                %429 = vst [vmem:[%s373 + $0xd8] sm:%s365] %v428
                %v430 = vld [vmem:[%s372 + $0x1c0] sm:%s365]
                %431 = vst [vmem:[%s373 + $0xe0] sm:%s365] %v430
                %v432 = vld [vmem:[%s372 + $0x1d0] sm:%s365]
                %433 = vst [vmem:[%s373 + $0xe8] sm:%s365] %v432
                %v434 = vld [vmem:[%s372 + $0x1e0] sm:%s365]
                %435 = vst [vmem:[%s373 + $0xf0] sm:%s365] %v434
                %v436 = vld [vmem:[%s372 + $0x1f0] sm:%s365]
                %437 = vst [vmem:[%s373 + $0xf8] sm:%s365] %v436
              $region79: #{born_sqrt.1} parent=73 // loop_footer
                %s371 = sadd.s32 1, %s367
              $region80: #{born_sqrt.1} parent=73 // loop_footer_branch
                %366 = sbr.rel target = $region76
              $region81: #{born_sqrt.1} parent=73 // loop_exit
                _
            $region74: #{born_sqrt.1} parent=65 // pred_fallthru
              _
          $region66: #{born_sqrt.1} parent=61 // pred_fallthru
            _
          %514 = vnop
        $region62: #{born_sqrt.1} parent=19 // pred_fallthru
          _
      $region20: #{born_sqrt.1} parent=5 // pred_fallthru
        _
      %p515 = scmp.le.s32.totalorder 1, %s12
      %p516 = scmp.lt.s32.totalorder %s12, 3
      %p517 = pnand %p515, %p516
      %p518 = pneg %p517
      // Predicated region
      $region97: #{born_sqrt.1} parent=5 // pred_check
        _
      $region98: #{born_sqrt.1} parent=5 // pred_check_branch
        %520 = sbr.rel (%p517) target = $region100
      $region99: #{born_sqrt.1} parent=5 // pred_region
        %s521 = ssub.s32 %s12, 1
        %s522 = sand.u32 %s74, 1
        %s523 = sand.u32 %s74, 1
        %s524 = smul.addr %s523, 256
        %s525 = scalar_lea.vmem [#allocation4], %s524
        // Predicated region
        $region101: #{born_sqrt.1} parent=99 // pred_check
          %p526 = pneg %p87
        $region102: #{born_sqrt.1} parent=99 // pred_check_branch
          %528 = sbr.rel (%p526) target = $region104
        $region103: #{born_sqrt.1} parent=99 // pred_region
          _
        $region104: #{born_sqrt.1} parent=99 // pred_fallthru
          _
        %s529 = sand.u32 %s102, 1
        %s530 = sand.u32 %s102, 1
        %s531 = smul.addr %s530, 256
        %s532 = scalar_lea.vmem [#allocation5], %s531
        // Predicated region
        $region105: #{born_sqrt.1} parent=99 // pred_check
          %p533 = pneg %p115
        $region106: #{born_sqrt.1} parent=99 // pred_check_branch
          %535 = sbr.rel (%p533) target = $region108
        $region107: #{born_sqrt.1} parent=99 // pred_region
          _
        $region108: #{born_sqrt.1} parent=99 // pred_fallthru
          _
        %s536 = smul.u32 2, %s23
        %s537 = smul.u32 2, %s24
        %p538 = scmp.lt.s32.totalorder %s536, 1
        %s539 = scalar_select %p538, %s536, 1
        %p540 = scmp.lt.s32.totalorder %s537, 1
        %s541 = scalar_select %p540, %s537, 1
        %s542 = smul.addr %s539, 2
        %s543 = sadd.s32 %s541, %s542
        %s544 = smul.addr %s543, 8
        %s545 = scalar_lea.vmem %s0, %s544
        %p546 = pneg %p59
        %p547 = pneg %p56
        %s548 = sand.u32 %s74, 1
        %s549 = sand.u32 %s74, 1
        %s550 = smul.addr %s549, 256
        %s551 = scalar_lea.vmem [#allocation4], %s550
        %p552 = pneg %p87
        %p553 = pneg %p84
        %s554 = sand.u32 %s102, 1
        %s555 = sand.u32 %s102, 1
        %s556 = smul.addr %s555, 256
        %s557 = scalar_lea.vmem [#allocation5], %s556
        %p558 = pneg %p115
        %p559 = pneg %p112
        %p560 = pneg %p143
        %p561 = pneg %p140
        %s562 = sand.u32 %s130, 1
        %s563 = scalar_lea.sflag [#allocation7], %s562
        %s564 = sand.u32 %s130, 1
        %s565 = smul.addr %s564, 16
        %s566 = scalar_lea.vmem [#allocation6], %s565
        %s567 = smul.u32 2, %s23
        %s568 = smul.u32 2, %s24
        %p569 = scmp.lt.s32.totalorder %s567, 1
        %s570 = scalar_select %p569, %s567, 1
        %p571 = scmp.lt.s32.totalorder %s568, 1
        %s572 = scalar_select %p571, %s568, 1
        %s573 = smul.addr %s570, 2
        %s574 = sadd.s32 %s572, %s573
        %s575 = smul.addr %s574, 8
        %s576 = scalar_lea.vmem %s0, %s575
        %s577 = smul.u32 2, %s23
        %s578 = smul.u32 2, %s24
        %s579 = smul.u32 32, %s24
        %s580 = smul.u32 32, %s24
        %s581 = smul.u32 2, %s23
        %p582 = scmp.eq.s32.totalorder %s24, 0
        // Predicated region
        $region109: #{born_sqrt.1} parent=99 // pred_check
          %p583 = pneg %p582
        $region110: #{born_sqrt.1} parent=99 // pred_check_branch
          %585 = sbr.rel (%p583) target = $region112
        $region111: #{born_sqrt.1} parent=99 // pred_region
          %586 = vst [vmem:[#allocation2] sm:$0xff] 0.0
          %587 = vst [vmem:[#allocation2 + $0x8] sm:$0xff] 0.0
          %588 = vst [vmem:[#allocation3] sm:$0xff] 0.0
          %589 = vst [vmem:[#allocation3 + $0x8] sm:$0xff] 0.0
        $region112: #{born_sqrt.1} parent=99 // pred_fallthru
          _
        %v590 = vld [vmem:[%s576] sm:$0xff]
        %v591 = vld [vmem:[%s576 + $0x8] sm:$0xff]
        %v592 = vld [vmem:[%s576 + $0x10] sm:$0xff]
        %v593 = vld [vmem:[%s576 + $0x18] sm:$0xff]
        %v594 = vmax.f32 %v590, 0.0
        %v595 = vmax.f32 %v591, 0.0
        %v596 = vmax.f32 %v592, 0.0
        %v597 = vmax.f32 %v593, 0.0
        %v598 = vrsqrt.pop %v594
        %v599 = vmul.f32 %v594, %v598
        %vm600 = vcmp.eq.f32.partialorder %v594, inf
        %v601 = vsel %vm600, %v594, %v599
        %vm602 = vcmp.eq.f32.partialorder %v594, 0.0
        %v603 = vand.u32 %v594, 2147483648
        %v604 = vsel %vm602, %v603, %v601
        %v605 = vrsqrt.pop %v595
        %v606 = vmul.f32 %v595, %v605
        %vm607 = vcmp.eq.f32.partialorder %v595, inf
        %v608 = vsel %vm607, %v595, %v606
        %vm609 = vcmp.eq.f32.partialorder %v595, 0.0
        %v610 = vand.u32 %v595, 2147483648
        %v611 = vsel %vm609, %v610, %v608
        %v612 = vrsqrt.pop %v596
        %v613 = vmul.f32 %v596, %v612
        %vm614 = vcmp.eq.f32.partialorder %v596, inf
        %v615 = vsel %vm614, %v596, %v613
        %vm616 = vcmp.eq.f32.partialorder %v596, 0.0
        %v617 = vand.u32 %v596, 2147483648
        %v618 = vsel %vm616, %v617, %v615
        %v619 = vrsqrt.pop %v597
        %v620 = vmul.f32 %v597, %v619
        %vm621 = vcmp.eq.f32.partialorder %v597, inf
        %v622 = vsel %vm621, %v597, %v620
        %vm623 = vcmp.eq.f32.partialorder %v597, 0.0
        %v624 = vand.u32 %v597, 2147483648
        %v625 = vsel %vm623, %v624, %v622
        %v626 = vld [vmem:[#allocation2] sm:$0xff]
        %v627 = vld [vmem:[#allocation2 + $0x8] sm:$0xff]
        %v628 = vld [vmem:[%s525] sm:$0xff]
        %v629 = vld [vmem:[%s525 + $0x8] sm:$0xff]
        %v630 = vld [vmem:[%s525 + $0x10] sm:$0xff]
        %v631 = vld [vmem:[%s525 + $0x18] sm:$0xff]
        %v632 = vld [vmem:[%s525 + $0x20] sm:$0xff]
        %v633 = vld [vmem:[%s525 + $0x28] sm:$0xff]
        %v634 = vld [vmem:[%s525 + $0x30] sm:$0xff]
        %v635 = vld [vmem:[%s525 + $0x38] sm:$0xff]
        %v636 = vld [vmem:[%s525 + $0x40] sm:$0xff]
        %v637 = vld [vmem:[%s525 + $0x48] sm:$0xff]
        %v638 = vld [vmem:[%s525 + $0x50] sm:$0xff]
        %v639 = vld [vmem:[%s525 + $0x58] sm:$0xff]
        %v640 = vld [vmem:[%s525 + $0x60] sm:$0xff]
        %v641 = vld [vmem:[%s525 + $0x68] sm:$0xff]
        %v642 = vld [vmem:[%s525 + $0x70] sm:$0xff]
        %v643 = vld [vmem:[%s525 + $0x78] sm:$0xff]
        %v644 = vld [vmem:[%s525 + $0x80] sm:$0xff]
        %v645 = vld [vmem:[%s525 + $0x88] sm:$0xff]
        %v646 = vld [vmem:[%s525 + $0x90] sm:$0xff]
        %v647 = vld [vmem:[%s525 + $0x98] sm:$0xff]
        %v648 = vld [vmem:[%s525 + $0xa0] sm:$0xff]
        %v649 = vld [vmem:[%s525 + $0xa8] sm:$0xff]
        %v650 = vld [vmem:[%s525 + $0xb0] sm:$0xff]
        %v651 = vld [vmem:[%s525 + $0xb8] sm:$0xff]
        %v652 = vld [vmem:[%s525 + $0xc0] sm:$0xff]
        %v653 = vld [vmem:[%s525 + $0xc8] sm:$0xff]
        %v654 = vld [vmem:[%s525 + $0xd0] sm:$0xff]
        %v655 = vld [vmem:[%s525 + $0xd8] sm:$0xff]
        %v656 = vld [vmem:[%s525 + $0xe0] sm:$0xff]
        %v657 = vld [vmem:[%s525 + $0xe8] sm:$0xff]
        %v658 = vld [vmem:[%s525 + $0xf0] sm:$0xff]
        %v659 = vld [vmem:[%s525 + $0xf8] sm:$0xff]
        %660 = vmatprep.subr.mxu0 0.0
        %661 = vmatpush1.msra.mxu0 %v643
        %662 = vmatprep.subr.mxu0 0.0
        %663 = vmatpush1.msra.mxu0 %v642
        %664 = vmatprep.subr.mxu0 0.0
        %665 = vmatpush1.msra.mxu0 %v641
        %666 = vmatprep.subr.mxu0 0.0
        %667 = vmatpush1.msra.mxu0 %v640
        %668 = vmatprep.subr.mxu0 0.0
        %669 = vmatpush1.msra.mxu0 %v639
        %670 = vmatprep.subr.mxu0 0.0
        %671 = vmatpush1.msra.mxu0 %v638
        %672 = vmatprep.subr.mxu0 0.0
        %673 = vmatpush1.msra.mxu0 %v637
        %674 = vmatprep.subr.mxu0 0.0
        %675 = vmatpush1.msra.mxu0 %v636
        %676 = vmatprep.subr.mxu0 0.0
        %677 = vmatpush1.msra.mxu0 %v635
        %678 = vmatprep.subr.mxu0 0.0
        %679 = vmatpush1.msra.mxu0 %v634
        %680 = vmatprep.subr.mxu0 0.0
        %681 = vmatpush1.msra.mxu0 %v633
        %682 = vmatprep.subr.mxu0 0.0
        %683 = vmatpush1.msra.mxu0 %v632
        %684 = vmatprep.subr.mxu0 0.0
        %685 = vmatpush1.msra.mxu0 %v631
        %686 = vmatprep.subr.mxu0 0.0
        %687 = vmatpush1.msra.mxu0 %v630
        %688 = vmatprep.subr.mxu0 0.0
        %689 = vmatpush1.msra.mxu0 %v629
        %690 = vmatprep.subr.mxu0 0.0
        %691 = vmatpush1.msra.mxu0 %v628
        %692 = vmatprep.subr.mxu0 0.0
        %693 = vmatpush2.msra.mxu0 %v659
        %694 = vmatprep.subr.mxu0 0.0
        %695 = vmatpush2.msra.mxu0 %v658
        %696 = vmatprep.subr.mxu0 0.0
        %697 = vmatpush2.msra.mxu0 %v657
        %698 = vmatprep.subr.mxu0 0.0
        %699 = vmatpush2.msra.mxu0 %v656
        %700 = vmatprep.subr.mxu0 0.0
        %701 = vmatpush2.msra.mxu0 %v655
        %702 = vmatprep.subr.mxu0 0.0
        %703 = vmatpush2.msra.mxu0 %v654
        %704 = vmatprep.subr.mxu0 0.0
        %705 = vmatpush2.msra.mxu0 %v653
        %706 = vmatprep.subr.mxu0 0.0
        %707 = vmatpush2.msra.mxu0 %v652
        %708 = vmatprep.subr.mxu0 0.0
        %709 = vmatpush2.msra.mxu0 %v651
        %710 = vmatprep.subr.mxu0 0.0
        %711 = vmatpush2.msra.mxu0 %v650
        %712 = vmatprep.subr.mxu0 0.0
        %713 = vmatpush2.msra.mxu0 %v649
        %714 = vmatprep.subr.mxu0 0.0
        %715 = vmatpush2.msra.mxu0 %v648
        %716 = vmatprep.subr.mxu0 0.0
        %717 = vmatpush2.msra.mxu0 %v647
        %718 = vmatprep.subr.mxu0 0.0
        %719 = vmatpush2.msra.mxu0 %v646
        %720 = vmatprep.subr.mxu0 0.0
        %721 = vmatpush2.msra.mxu0 %v645
        %722 = vmatprep.subr.mxu0 0.0
        %723 = vmatpush2.msra.mxu0 %v644
        %724 = vmatprep.mubr.f32.mxu0 %v611
        %725 = vmatmul.mubr.f32.gmra.mxu0 %v604
        %v726 = vpop.f32.mrf.mxu0
        %v727 = vadd.f32 0.0, %v726
        %v728 = vpop.f32.mrf.mxu0
        %729 = vmatprep.mubr.f32.mxu0 %v625
        %730 = vmatmul.mubr.f32.gmra.mxu0 %v618
        %v731 = vpop.f32.mrf.mxu0
        %v732 = vadd.f32 0.0, %v731
        %v733 = vpop.f32.mrf.mxu0
        %734 = vdwg.mxu0
        %v735 = vadd.f32 %v626, %v727
        %v736 = vadd.f32 %v627, %v732
        %737 = vst [vmem:[#allocation2] sm:$0xff] %v735
        %738 = vst [vmem:[#allocation2 + $0x8] sm:$0xff] %v736
        %v739 = vld [vmem:[#allocation3] sm:$0xff]
        %v740 = vld [vmem:[#allocation3 + $0x8] sm:$0xff]
        %v741 = vld [vmem:[%s532] sm:$0xff]
        %v742 = vld [vmem:[%s532 + $0x8] sm:$0xff]
        %v743 = vld [vmem:[%s532 + $0x10] sm:$0xff]
        %v744 = vld [vmem:[%s532 + $0x18] sm:$0xff]
        %v745 = vld [vmem:[%s532 + $0x20] sm:$0xff]
        %v746 = vld [vmem:[%s532 + $0x28] sm:$0xff]
        %v747 = vld [vmem:[%s532 + $0x30] sm:$0xff]
        %v748 = vld [vmem:[%s532 + $0x38] sm:$0xff]
        %v749 = vld [vmem:[%s532 + $0x40] sm:$0xff]
        %v750 = vld [vmem:[%s532 + $0x48] sm:$0xff]
        %v751 = vld [vmem:[%s532 + $0x50] sm:$0xff]
        %v752 = vld [vmem:[%s532 + $0x58] sm:$0xff]
        %v753 = vld [vmem:[%s532 + $0x60] sm:$0xff]
        %v754 = vld [vmem:[%s532 + $0x68] sm:$0xff]
        %v755 = vld [vmem:[%s532 + $0x70] sm:$0xff]
        %v756 = vld [vmem:[%s532 + $0x78] sm:$0xff]
        %v757 = vld [vmem:[%s532 + $0x80] sm:$0xff]
        %v758 = vld [vmem:[%s532 + $0x88] sm:$0xff]
        %v759 = vld [vmem:[%s532 + $0x90] sm:$0xff]
        %v760 = vld [vmem:[%s532 + $0x98] sm:$0xff]
        %v761 = vld [vmem:[%s532 + $0xa0] sm:$0xff]
        %v762 = vld [vmem:[%s532 + $0xa8] sm:$0xff]
        %v763 = vld [vmem:[%s532 + $0xb0] sm:$0xff]
        %v764 = vld [vmem:[%s532 + $0xb8] sm:$0xff]
        %v765 = vld [vmem:[%s532 + $0xc0] sm:$0xff]
        %v766 = vld [vmem:[%s532 + $0xc8] sm:$0xff]
        %v767 = vld [vmem:[%s532 + $0xd0] sm:$0xff]
        %v768 = vld [vmem:[%s532 + $0xd8] sm:$0xff]
        %v769 = vld [vmem:[%s532 + $0xe0] sm:$0xff]
        %v770 = vld [vmem:[%s532 + $0xe8] sm:$0xff]
        %v771 = vld [vmem:[%s532 + $0xf0] sm:$0xff]
        %v772 = vld [vmem:[%s532 + $0xf8] sm:$0xff]
        %773 = vmatprep.subr.mxu0 0.0
        %774 = vmatpush1.msra.mxu0 %v756
        %775 = vmatprep.subr.mxu0 0.0
        %776 = vmatpush1.msra.mxu0 %v755
        %777 = vmatprep.subr.mxu0 0.0
        %778 = vmatpush1.msra.mxu0 %v754
        %779 = vmatprep.subr.mxu0 0.0
        %780 = vmatpush1.msra.mxu0 %v753
        %781 = vmatprep.subr.mxu0 0.0
        %782 = vmatpush1.msra.mxu0 %v752
        %783 = vmatprep.subr.mxu0 0.0
        %784 = vmatpush1.msra.mxu0 %v751
        %785 = vmatprep.subr.mxu0 0.0
        %786 = vmatpush1.msra.mxu0 %v750
        %787 = vmatprep.subr.mxu0 0.0
        %788 = vmatpush1.msra.mxu0 %v749
        %789 = vmatprep.subr.mxu0 0.0
        %790 = vmatpush1.msra.mxu0 %v748
        %791 = vmatprep.subr.mxu0 0.0
        %792 = vmatpush1.msra.mxu0 %v747
        %793 = vmatprep.subr.mxu0 0.0
        %794 = vmatpush1.msra.mxu0 %v746
        %795 = vmatprep.subr.mxu0 0.0
        %796 = vmatpush1.msra.mxu0 %v745
        %797 = vmatprep.subr.mxu0 0.0
        %798 = vmatpush1.msra.mxu0 %v744
        %799 = vmatprep.subr.mxu0 0.0
        %800 = vmatpush1.msra.mxu0 %v743
        %801 = vmatprep.subr.mxu0 0.0
        %802 = vmatpush1.msra.mxu0 %v742
        %803 = vmatprep.subr.mxu0 0.0
        %804 = vmatpush1.msra.mxu0 %v741
        %805 = vmatprep.subr.mxu0 0.0
        %806 = vmatpush2.msra.mxu0 %v772
        %807 = vmatprep.subr.mxu0 0.0
        %808 = vmatpush2.msra.mxu0 %v771
        %809 = vmatprep.subr.mxu0 0.0
        %810 = vmatpush2.msra.mxu0 %v770
        %811 = vmatprep.subr.mxu0 0.0
        %812 = vmatpush2.msra.mxu0 %v769
        %813 = vmatprep.subr.mxu0 0.0
        %814 = vmatpush2.msra.mxu0 %v768
        %815 = vmatprep.subr.mxu0 0.0
        %816 = vmatpush2.msra.mxu0 %v767
        %817 = vmatprep.subr.mxu0 0.0
        %818 = vmatpush2.msra.mxu0 %v766
        %819 = vmatprep.subr.mxu0 0.0
        %820 = vmatpush2.msra.mxu0 %v765
        %821 = vmatprep.subr.mxu0 0.0
        %822 = vmatpush2.msra.mxu0 %v764
        %823 = vmatprep.subr.mxu0 0.0
        %824 = vmatpush2.msra.mxu0 %v763
        %825 = vmatprep.subr.mxu0 0.0
        %826 = vmatpush2.msra.mxu0 %v762
        %827 = vmatprep.subr.mxu0 0.0
        %828 = vmatpush2.msra.mxu0 %v761
        %829 = vmatprep.subr.mxu0 0.0
        %830 = vmatpush2.msra.mxu0 %v760
        %831 = vmatprep.subr.mxu0 0.0
        %832 = vmatpush2.msra.mxu0 %v759
        %833 = vmatprep.subr.mxu0 0.0
        %834 = vmatpush2.msra.mxu0 %v758
        %835 = vmatprep.subr.mxu0 0.0
        %836 = vmatpush2.msra.mxu0 %v757
        %837 = vmatprep.mubr.f32.mxu0 %v611
        %838 = vmatmul.mubr.f32.gmra.mxu0 %v604
        %v839 = vpop.f32.mrf.mxu0
        %v840 = vadd.f32 0.0, %v839
        %v841 = vpop.f32.mrf.mxu0
        %842 = vmatprep.mubr.f32.mxu0 %v625
        %843 = vmatmul.mubr.f32.gmra.mxu0 %v618
        %v844 = vpop.f32.mrf.mxu0
        %v845 = vadd.f32 0.0, %v844
        %v846 = vpop.f32.mrf.mxu0
        %847 = vdwg.mxu0
        %v848 = vadd.f32 %v739, %v840
        %v849 = vadd.f32 %v740, %v845
        %850 = vst [vmem:[#allocation3] sm:$0xff] %v848
        %851 = vst [vmem:[#allocation3 + $0x8] sm:$0xff] %v849
        // Predicated region
        $region113: #{born_sqrt.1} parent=99 // pred_check
          %p852 = pneg %p582
        $region114: #{born_sqrt.1} parent=99 // pred_check_branch
          %854 = sbr.rel (%p852) target = $region116
        $region115: #{born_sqrt.1} parent=99 // pred_region
          %v855 = vld [vmem:[#allocation2] sm:$0xff]
          %v856 = vld [vmem:[#allocation2 + $0x8] sm:$0xff]
          %v857 = vld [vmem:[#allocation3] sm:$0xff]
          %v858 = vld [vmem:[#allocation3 + $0x8] sm:$0xff]
          %v859 = vmul.f32 %v855, %v855
          %v860 = vmul.f32 %v856, %v856
          %v861 = vmul.f32 %v857, %v857
          %v862 = vmul.f32 %v858, %v858
          %v863 = vadd.f32 %v859, %v861
          %v864 = vadd.f32 %v860, %v862
          %865 = vst [vmem:[%s566] sm:$0xff] %v863
          %866 = vst [vmem:[%s566 + $0x8] sm:$0xff] %v864
        $region116: #{born_sqrt.1} parent=99 // pred_fallthru
          _
        %s867 = sand.u32 %s130, 1
        %s868 = scalar_lea.sflag [#allocation7], %s867
        %s869 = sand.u32 %s130, 1
        %s870 = smul.addr %s869, 16
        %s871 = scalar_lea.vmem [#allocation6], %s870
        // Predicated region
        $region117: #{born_sqrt.1} parent=99 // pred_check
          %p872 = pneg %p140
        $region118: #{born_sqrt.1} parent=99 // pred_check_branch
          %874 = sbr.rel (%p872) target = $region120
        $region119: #{born_sqrt.1} parent=99 // pred_region
          %s875 = smul.u32 2, %s23
          %s877 = ssub.s32 256, 256
          %878 = vsyncadd %s868, %s877
          %s879 = smul.addr %s875, 2
          %s880 = sadd.s32 %s22, %s879
          %s881 = smul.addr %s880, 128
          %s882 = scalar_lea.hbm %s3, %s881
          %s883 = sshll.u32 %s871, 4
          %s884 = int_to_ptr.vmem [resolvable:$true] %s883
          %889 = dma.vmem_to_hbm [thread:$0]  %s884, 256, %s882, %s868, 128, 256, 8
        $region120: #{born_sqrt.1} parent=99 // pred_fallthru
          _
      $region100: #{born_sqrt.1} parent=5 // pred_fallthru
        _
      %p890 = scmp.le.s32.totalorder 2, %s12
      // Predicated region
      $region121: #{born_sqrt.1} parent=5 // pred_check
        %p891 = pneg %p890
      $region122: #{born_sqrt.1} parent=5 // pred_check_branch
        %893 = sbr.rel (%p891) target = $region124
      $region123: #{born_sqrt.1} parent=5 // pred_region
        %s894 = ssub.s32 %s12, 2
        // Predicated region
        $region125: #{born_sqrt.1} parent=123 // pred_check
          %p895 = pneg %p146
        $region126: #{born_sqrt.1} parent=123 // pred_check_branch
          %897 = sbr.rel (%p895) target = $region128
        $region127: #{born_sqrt.1} parent=123 // pred_region
          %s898 = sand.u32 %s131, 1
          %s899 = scalar_lea.sflag [#allocation7], %s898
          %s900 = sand.u32 %s131, 1
          %s901 = smul.addr %s900, 16
          %s902 = scalar_lea.vmem [#allocation6], %s901
          %903 = dma.done %s899, 256
        $region128: #{born_sqrt.1} parent=123 // pred_fallthru
          _
      $region124: #{born_sqrt.1} parent=5 // pred_fallthru
        _
    $region6: #{born_sqrt.1} parent=1 // loop_footer
      %s16 = sadd.s32 1, %s12
    $region7: #{born_sqrt.1} parent=1 // loop_footer_branch
      %11 = sbr.rel target = $region3
    $region8: #{born_sqrt.1} parent=1 // loop_exit
      _
    %904 = vsyncpa [#allocation7], 1
    %s905 = scalar_lea.sflag [#allocation7], 1
    %906 = vsyncpa %s905, 1

</llo_original>
